<compile_context>
chip_gen: v5e
topology: v5e:2x2
jax: 0.10.0
libtpu: 0.0.40
codegen_flags: <defaults>
</compile_context>

<pallas_src>
import jax
import jax.numpy as jnp
from jax import lax
from jax.experimental import pallas as pl
from jax.experimental.pallas import tpu as pltpu

_LANES = 128
_SUBLANES = 8


def _round_up(a, b):
    return ((a + b - 1) // b) * b


def _round_down(a, b):
    return (a // b) * b


def _tpu_device_kind():
    try:
        return str(getattr(jax.devices()[0], "device_kind", "")).lower()
    except Exception:
        return ""


def _tensorcores_per_device():
    kind = _tpu_device_kind()
    # v4 (megacore) and v7x present 2 TensorCores per Pallas device;
    # v5e / v6e are single-TC, so a parallel chunk axis buys nothing there.
    if "v4" in kind or "v7" in kind or "7x" in kind:
        return 2
    return 1


def _is_v7x():
    kind = _tpu_device_kind()
    return "v7" in kind or "7x" in kind


def _input_spec(block, index_map, n_bufs):
    """Input BlockSpec; deeper multi-buffering when requested and supported."""
    buffered = getattr(pl, "Buffered", None)
    if n_bufs > 2 and buffered is not None:
        try:
            return pl.BlockSpec(block, index_map, pipeline_mode=buffered(n_bufs))
        except TypeError:  # older jax without pipeline_mode: default 2-deep
            pass
    return pl.BlockSpec(block, index_map)


def content_forward(x, target, *, max_tile_rows=2048):
    """Equivalent of Content(target).forward(x): returns (x, mse_loss)."""
    assert x.shape == target.shape, "x and target must have the same shape"
    n_elem = int(x.size)
    assert n_elem > 0

    xf = x.reshape(-1)
    tf = target.reshape(-1)

    min_len = _SUBLANES * _LANES  # one (8, 128) tile
    if n_elem % _LANES != 0 or n_elem < min_len:
        # Rare fallback (conv feature maps have C*H*W a multiple of 128):
        # zero-pad BOTH operands so the tail contributes (0-0)^2 = 0.  Padding
        # is < 1024 elements, and this is the ONLY path that still copies.
        padded_len = max(_round_up(n_elem, _LANES), min_len)
        xf = jnp.pad(xf, (0, padded_len - n_elem))
        tf = jnp.pad(tf, (0, padded_len - n_elem))
    else:
        padded_len = n_elem  # reshape below is a free bitcast, no HBM copy

    rows = padded_len // _LANES  # >= 8
    x2 = xf.reshape(rows, _LANES)
    t2 = tf.reshape(rows, _LANES)

    # ----- tile / accumulator sizing (all static Python ints) -----
    if rows >= 128 and max_tile_rows >= 128:
        tile_rows = min(_round_down(max_tile_rows, 128), _round_down(rows, 128))
        acc_rows = 128                     # 16-vreg accumulator: wide-ILP adds
    else:
        tile_rows = max(_SUBLANES,
                        min(_round_down(max_tile_rows, _SUBLANES),
                            _round_down(rows, _SUBLANES)))
        acc_rows = tile_rows               # tiny inputs: accumulate tile as-is

    total_tiles = -(-rows // tile_rows)    # ceil
    full_tiles = rows // tile_rows
    tail_rows = rows - full_tiles * tile_rows  # valid rows in the partial tile

    num_chunks = 2 if (_tensorcores_per_device() >= 2 and total_tiles >= 2) else 1
    steps = -(-total_tiles // num_chunks)
    exact_grid = (num_chunks * steps == total_tiles)

    if exact_grid:
        def in_map(p, j):
            return (p * steps + j, 0)
    else:
        last_tile = total_tiles - 1

        def in_map(p, j):
            # Clamp trailing (empty) grid points onto the last real tile; their
            # contribution is skipped inside the kernel.
            return (jnp.minimum(p * steps + j, last_tile), 0)

    def kernel(x_ref, t_ref, o_ref):
        j = pl.program_id(1)

        @pl.when(j == 0)
        def _init():
            o_ref[...] = jnp.zeros_like(o_ref)

        xv = x_ref[...].astype(jnp.float32)
        tv = t_ref[...].astype(jnp.float32)
        d = xv - tv
        sq = d * d

        def fold(v):
            if acc_rows == tile_rows:
                return v
            return jnp.sum(v.reshape(tile_rows // acc_rows, acc_rows, _LANES),
                           axis=0)

        if exact_grid and tail_rows == 0:
            # Every grid point maps to a fully valid tile: no conditionals.
            o_ref[...] += fold(sq)
        else:
            l = pl.program_id(0) * steps + j

            @pl.when(l < full_tiles)
            def _full_tile():
                o_ref[...] += fold(sq)

            if tail_rows:
                @pl.when(l == full_tiles)
                def _partial_tile():
                    # Exactly ONE tile in the whole grid takes this path; the
                    # bound is a compile-time constant.  jnp.where (not a
                    # multiply) so garbage rows of the ragged block can never
                    # poison the sum (e.g. via NaN/Inf).
                    row = lax.broadcasted_iota(jnp.int32, (tile_rows, _LANES), 0)
                    o_ref[...] += fold(jnp.where(row < tail_rows, sq, 0.0))
            # Grid points with l > full_tiles (only when total_tiles is odd and
            # num_chunks == 2) contribute nothing.

    n_bufs = 3 if (_is_v7x() and total_tiles >= 3) else 2
    itemsize = max(jnp.dtype(x.dtype).itemsize, jnp.dtype(target.dtype).itemsize)
    vmem_limit = int(2 * n_bufs * tile_rows * _LANES * itemsize   # pipelined inputs
                     + 2 * acc_rows * _LANES * 4                  # output block
                     + (4 << 20))                                 # headroom

    partials = pl.pallas_call(
        kernel,
        out_shape=jax.ShapeDtypeStruct((num_chunks, acc_rows, _LANES), jnp.float32),
        grid_spec=pltpu.PrefetchScalarGridSpec(
            num_scalar_prefetch=0,
            grid=(num_chunks, steps),
            in_specs=[_input_spec((tile_rows, _LANES), in_map, n_bufs),
                      _input_spec((tile_rows, _LANES), in_map, n_bufs)],
            out_specs=pl.BlockSpec((None, acc_rows, _LANES),
                                   lambda p, j: (p, 0, 0)),
        ),
        compiler_params=pltpu.CompilerParams(
            dimension_semantics=("parallel", "arbitrary"),
            vmem_limit_bytes=vmem_limit,
        ),
    )(x2, t2)

    # Sublane + lane + cross-chunk collapse on the tiny partial-sum array.
    loss = jnp.sum(partials) * (1.0 / float(n_elem))
    # The module returns its input unchanged: no copy, just pass x through.
    return x, loss


if __name__ == "__main__":
    key = jax.random.PRNGKey(0)
    ks = jax.random.split(key, 8)

    # NCHW, small shapes: batch=2, channels=4, spatial=16x16
    x = jax.random.normal(ks[0], (2, 4, 16, 16), dtype=jnp.float32)
    target = jax.random.normal(ks[1], (2, 4, 16, 16), dtype=jnp.float32)
    y, loss = content_forward(x, target)
    jax.block_until_ready((y, loss))
    ref = jnp.mean((x - target) ** 2)
    assert jnp.allclose(loss, ref, rtol=1e-5, atol=1e-6), (loss, ref)
    assert y is x or jnp.array_equal(y, x)

    # Ragged element count (< multiple of 128): exercises the small-pad fallback.
    xr = jax.random.normal(ks[2], (2, 3, 5, 7), dtype=jnp.float32)
    tr = jax.random.normal(ks[3], (2, 3, 5, 7), dtype=jnp.float32)
    _, lr = content_forward(xr, tr)
    jax.block_until_ready(lr)
    ref_r = jnp.mean((xr - tr) ** 2)
    assert jnp.allclose(lr, ref_r, rtol=1e-5, atol=1e-6), (lr, ref_r)

    # Ragged row count: exercises the in-kernel last-tile mask (no padding).
    xm = jax.random.normal(ks[4], (20, 128), dtype=jnp.float32)
    tmm = jax.random.normal(ks[5], (20, 128), dtype=jnp.float32)
    _, lm = content_forward(xm, tmm)
    jax.block_until_ready(lm)
    ref_m = jnp.mean((xm - tmm) ** 2)
    assert jnp.allclose(lm, ref_m, rtol=1e-5, atol=1e-6), (lm, ref_m)

    # Multi-step grid + folded (128,128) accumulator + partial tile
    # (+ clamped/skipped trailing grid point on 2-TensorCore chips).
    xs = jax.random.normal(ks[6], (520, 128), dtype=jnp.float32)
    ts = jax.random.normal(ks[7], (520, 128), dtype=jnp.float32)
    _, lsum = content_forward(xs, ts, max_tile_rows=128)
    jax.block_until_ready(lsum)
    ref_s = jnp.mean((xs - ts) ** 2)
    assert jnp.allclose(lsum, ref_s, rtol=1e-5, atol=1e-6), (lsum, ref_s)

    print("KERNEL_OK")
</pallas_src>

<mosaic_0001>
module attributes {stable_mosaic.version = 11 : i64} {
  func.func @kernel(%arg0: i32, %arg1: i32, %arg2: memref<16x128xf32, #tpu.memory_space<vmem>>, %arg3: memref<16x128xf32, #tpu.memory_space<vmem>>, %arg4: memref<1x16x128xf32, #tpu.memory_space<vmem>>) attributes {dimension_semantics = [#tpu.dimension_semantics<parallel>, #tpu.dimension_semantics<arbitrary>], iteration_bounds = array<i64: 1, 1>, scalar_prefetch = 0 : i64, scratch_operands = 0 : i64, tpu.core_type = #tpu.core_type<tc>, window_params = [{transform_indices = @transform_0, window_bounds = array<i64: 16, 128>}, {transform_indices = @transform_1, window_bounds = array<i64: 16, 128>}, {transform_indices = @transform_2, window_bounds = array<i64: 1, 16, 128>}]} {
    %c0_i32 = arith.constant 0 : i32
    %0 = arith.cmpi eq, %arg1, %c0_i32 : i32
    %1 = arith.extui %0 : i1 to i32
    %c0_i32_0 = arith.constant 0 : i32
    %2 = arith.cmpi ne, %1, %c0_i32_0 : i32
    scf.if %2 {
      %cst = arith.constant 0.000000e+00 : f32
      %13 = vector.broadcast %cst : f32 to vector<16x128xf32>
      %c0_10 = arith.constant 0 : index
      %c0_11 = arith.constant 0 : index
      %c0_12 = arith.constant 0 : index
      %14 = vector.load %arg4[%c0_10, %c0_11, %c0_12] : memref<1x16x128xf32, #tpu.memory_space<vmem>>, vector<1x16x128xf32>
      %15 = vector.shape_cast %14 : vector<1x16x128xf32> to vector<16x128xf32>
      %16 = vector.shape_cast %13 : vector<16x128xf32> to vector<1x16x128xf32>
      tpu.vector_store %arg4[%c0_10, %c0_11, %c0_12], %16 {strides = array<i32>} : memref<1x16x128xf32, #tpu.memory_space<vmem>>, vector<1x16x128xf32>,
    } else {
    }
    %c0 = arith.constant 0 : index
    %c0_1 = arith.constant 0 : index
    %3 = vector.load %arg2[%c0, %c0_1] : memref<16x128xf32, #tpu.memory_space<vmem>>, vector<16x128xf32>
    %c0_2 = arith.constant 0 : index
    %c0_3 = arith.constant 0 : index
    %4 = vector.load %arg3[%c0_2, %c0_3] : memref<16x128xf32, #tpu.memory_space<vmem>>, vector<16x128xf32>
    %5 = arith.subf %3, %4 : vector<16x128xf32>
    %6 = arith.mulf %5, %5 : vector<16x128xf32>
    %c0_4 = arith.constant 0 : index
    %c0_5 = arith.constant 0 : index
    %c0_6 = arith.constant 0 : index
    %7 = vector.load %arg4[%c0_4, %c0_5, %c0_6] : memref<1x16x128xf32, #tpu.memory_space<vmem>>, vector<1x16x128xf32>
    %8 = vector.shape_cast %7 : vector<1x16x128xf32> to vector<16x128xf32>
    %9 = arith.addf %8, %6 : vector<16x128xf32>
    %c0_7 = arith.constant 0 : index
    %c0_8 = arith.constant 0 : index
    %c0_9 = arith.constant 0 : index
    %10 = vector.load %arg4[%c0_7, %c0_8, %c0_9] : memref<1x16x128xf32, #tpu.memory_space<vmem>>, vector<1x16x128xf32>
    %11 = vector.shape_cast %10 : vector<1x16x128xf32> to vector<16x128xf32>
    %12 = vector.shape_cast %9 : vector<16x128xf32> to vector<1x16x128xf32>
    tpu.vector_store %arg4[%c0_7, %c0_8, %c0_9], %12 {strides = array<i32>} : memref<1x16x128xf32, #tpu.memory_space<vmem>>, vector<1x16x128xf32>,
    return
  }
  func.func @transform_0(%arg0: i32, %arg1: i32) -> (i32, i32) {
    %c1_i32 = arith.constant 1 : i32
    %0 = arith.muli %arg0, %c1_i32 : i32
    %1 = arith.addi %0, %arg1 : i32
    %c0_i32 = arith.constant 0 : i32
    %c0_i32_0 = arith.constant 0 : i32
    return %1, %c0_i32 : i32, i32
  }
  func.func @transform_1(%arg0: i32, %arg1: i32) -> (i32, i32) {
    %c1_i32 = arith.constant 1 : i32
    %0 = arith.muli %arg0, %c1_i32 : i32
    %1 = arith.addi %0, %arg1 : i32
    %c0_i32 = arith.constant 0 : i32
    %c0_i32_0 = arith.constant 0 : i32
    return %1, %c0_i32 : i32, i32
  }
  func.func @transform_2(%arg0: i32, %arg1: i32) -> (i32, i32, i32) {
    %c0_i32 = arith.constant 0 : i32
    %c0_i32_0 = arith.constant 0 : i32
    %c0_i32_1 = arith.constant 0 : i32
    return %arg0, %c0_i32, %c0_i32_0 : i32, i32, i32
  }
}

</mosaic_0001>

<llo_original>
// kernel: tpu_custom_call.1
$region0: #{tpu_custom_call.1}
  #allocation0 [shape = 'u32[]', space=smem, size = 0x4, offset = 0x4, fixed_abs, tag = 'smem constant byte address 0x4 - core index']
  #allocation1 [shape = 'u32[72,128]{1,0:T(1,128)}', space=vmem, size = 0x9000, scoped, tag = 'internal scratch']
  %s0 = inlined_call_operand.hbm [shape: f32[16,128], index: 0, kind: input, shape index: {}]
  %s1 = inlined_call_operand.hbm [shape: f32[16,128], index: 1, kind: input, shape index: {}]
  %s2 = inlined_call_operand.hbm [shape: f32[1,16,128], index: 2, kind: output, shape index: {}]
  %s3 = sld [smem:[#allocation0]]
  $region30: #{tpu_custom_call.1} parent=0
    _
  %s5 = ssub.s32 1, %s3
  %s6 = scalar_select 0, %s5, %s3
  $region1: #{tpu_custom_call.1} parent=0
    #allocation2 [shape = 'u8[8192]{0}', space=vmem, size = 0x2000, scoped, tag = 'input window, operand 0, single buffered']
    #allocation3 [shape = 's32[1]{0}', space=sflag, size = 0x4, scoped, tag = 'scoped memory for tpu_custom_call.1']
    #allocation4 [shape = 's32[1]{0}', space=sflag, size = 0x4, scoped, tag = 'scoped memory for tpu_custom_call.1']
    #allocation5 [shape = 'u8[8192]{0}', space=vmem, size = 0x2000, scoped, tag = 'input window, operand 1, single buffered']
    #allocation6 [shape = 's32[1]{0}', space=sflag, size = 0x4, scoped, tag = 'scoped memory for tpu_custom_call.1']
    #allocation7 [shape = 'u8[8192]{0}', space=vmem, size = 0x2000, scoped, tag = 'output window, operand 0, single buffered']
    %7 = vsyncpa [#allocation3], 0
    %8 = vsyncpa [#allocation6], 0
    %9 = vsyncpa [#allocation4], 0
    // Predicated region
    $region2: #{tpu_custom_call.1} parent=1 // pred_check
      _
    $region3: #{tpu_custom_call.1} parent=1 // pred_check_branch
      %11 = sbr.rel (0) target = $region5
    $region4: #{tpu_custom_call.1} parent=1 // pred_region
      %s12 = sadd.s32 0, 0
      %s13 = smul.u32 2, %s12
      %15 = vsyncadd [#allocation3], 0
      %s16 = smul.addr %s13, 8
      %s17 = scalar_lea.hbm %s0, %s16
      %s18 = sshll.u32 %s17, 4
      %s19 = int_to_ptr.hbm [resolvable:$true] %s18
      %s20 = sshll.u32 [#allocation2], 4
      %s21 = int_to_ptr.vmem [resolvable:$true] %s20
      %26 = dma.hbm_to_vmem [thread:$0]  %s19, 256, %s21, [#allocation3], 128, 128, 8
    $region5: #{tpu_custom_call.1} parent=1 // pred_fallthru
      _
    // Predicated region
    $region6: #{tpu_custom_call.1} parent=1 // pred_check
      _
    $region7: #{tpu_custom_call.1} parent=1 // pred_check_branch
      %28 = sbr.rel (0) target = $region9
    $region8: #{tpu_custom_call.1} parent=1 // pred_region
      %s29 = sadd.s32 0, 0
      %s30 = smul.u32 2, %s29
      %32 = vsyncadd [#allocation6], 0
      %s33 = smul.addr %s30, 8
      %s34 = scalar_lea.hbm %s1, %s33
      %s35 = sshll.u32 %s34, 4
      %s36 = int_to_ptr.hbm [resolvable:$true] %s35
      %s37 = sshll.u32 [#allocation5], 4
      %s38 = int_to_ptr.vmem [resolvable:$true] %s37
      %43 = dma.hbm_to_vmem [thread:$0]  %s36, 256, %s38, [#allocation6], 128, 128, 8
    $region9: #{tpu_custom_call.1} parent=1 // pred_fallthru
      _
    // Predicated region
    $region10: #{tpu_custom_call.1} parent=1 // pred_check
      _
    $region11: #{tpu_custom_call.1} parent=1 // pred_check_branch
      %45 = sbr.rel (0) target = $region13
    $region12: #{tpu_custom_call.1} parent=1 // pred_region
      %47 = dma.done [#allocation3], 256
    $region13: #{tpu_custom_call.1} parent=1 // pred_fallthru
      _
    // Predicated region
    $region14: #{tpu_custom_call.1} parent=1 // pred_check
      _
    $region15: #{tpu_custom_call.1} parent=1 // pred_check_branch
      %49 = sbr.rel (0) target = $region17
    $region16: #{tpu_custom_call.1} parent=1 // pred_region
      %51 = dma.done [#allocation6], 256
    $region17: #{tpu_custom_call.1} parent=1 // pred_fallthru
      _
    %s52 = sadd.s32 0, 0
    %s53 = smul.u32 2, %s52
    %s54 = sadd.s32 0, 0
    %s55 = smul.u32 2, %s54
    %p56 = scmp.eq.s32.totalorder 0, 0
    // Predicated region
    $region18: #{tpu_custom_call.1} parent=1 // pred_check
      %p57 = pneg %p56
    $region19: #{tpu_custom_call.1} parent=1 // pred_check_branch
      %59 = sbr.rel (%p57) target = $region21
    $region20: #{tpu_custom_call.1} parent=1 // pred_region
      %60 = vst [vmem:[#allocation7] sm:$0xff] 0.0
      %61 = vst [vmem:[#allocation7 + $0x8] sm:$0xff] 0.0
    $region21: #{tpu_custom_call.1} parent=1 // pred_fallthru
      _
    %v62 = vld [vmem:[#allocation2] sm:$0xff]
    %v63 = vld [vmem:[#allocation2 + $0x8] sm:$0xff]
    %v64 = vld [vmem:[#allocation5] sm:$0xff]
    %v65 = vld [vmem:[#allocation5 + $0x8] sm:$0xff]
    %v66 = vsub.f32 %v62, %v64
    %v67 = vsub.f32 %v63, %v65
    %v68 = vmul.f32 %v66, %v66
    %v69 = vmul.f32 %v67, %v67
    %v70 = vld [vmem:[#allocation7] sm:$0xff]
    %v71 = vld [vmem:[#allocation7 + $0x8] sm:$0xff]
    %v72 = vadd.f32 %v70, %v68
    %v73 = vadd.f32 %v71, %v69
    %74 = vst [vmem:[#allocation7] sm:$0xff] %v72
    %75 = vst [vmem:[#allocation7 + $0x8] sm:$0xff] %v73
    // Predicated region
    $region22: #{tpu_custom_call.1} parent=1 // pred_check
      _
    $region23: #{tpu_custom_call.1} parent=1 // pred_check_branch
      %77 = sbr.rel (0) target = $region25
    $region24: #{tpu_custom_call.1} parent=1 // pred_region
      %79 = vsyncadd [#allocation4], 0
      %s80 = sshll.u32 [#allocation7], 4
      %s81 = int_to_ptr.vmem [resolvable:$true] %s80
      %s82 = sshll.u32 %s2, 4
      %s83 = int_to_ptr.hbm [resolvable:$true] %s82
      %88 = dma.vmem_to_hbm [thread:$0]  %s81, 256, %s83, [#allocation4], 128, 128, 8
    $region25: #{tpu_custom_call.1} parent=1 // pred_fallthru
      _
    // Predicated region
    $region26: #{tpu_custom_call.1} parent=1 // pred_check
      _
    $region27: #{tpu_custom_call.1} parent=1 // pred_check_branch
      %90 = sbr.rel (0) target = $region29
    $region28: #{tpu_custom_call.1} parent=1 // pred_region
      %92 = dma.done [#allocation4], 256
    $region29: #{tpu_custom_call.1} parent=1 // pred_fallthru
      _
    %93 = vsyncpa [#allocation3], 1
    %94 = vsyncpa [#allocation6], 1
    %95 = vsyncpa [#allocation4], 1

</llo_original>
